<compile_context>
chip_gen: v7x
topology: tpu7x:2x2x1
jax: 0.10.0
libtpu: 0.0.40
codegen_flags: <defaults>
</compile_context>

<pallas_src>
import jax
import jax.numpy as jnp
from jax.experimental import pallas as pl
from jax.experimental.pallas import tpu as pltpu


def soft_attention_kernel(enc_ref, dec_ref, wet_ref, wdt_ref, b_ref, wf_ref,
                          ctx_ref, alpha_ref):
    tb, L, E = enc_ref.shape            # static block shape
    A = wet_ref.shape[1]

    enc = enc_ref[...]                  # (TB, L, E)
    dec = dec_ref[...]                  # (TB, D)

    # encoder_att: one tall matmul over all TB*L rows (fills MXU rows).
    att1 = jnp.dot(enc.reshape(tb * L, E), wet_ref[...],
                   preferred_element_type=jnp.float32)            # (TB*L, A)

    # decoder_att + folded (encoder_att.bias + decoder_att.bias).
    att2 = jnp.dot(dec, wdt_ref[...],
                   preferred_element_type=jnp.float32) + b_ref[...]  # (TB, A)

    # relu(att1 + att2.unsqueeze(1))
    h = jnp.maximum(att1.reshape(tb, L, A) + att2[:, None, :], 0.0)  # (TB, L, A)

    # full_att as VPU multiply + lane reduction (full_att.bias dropped:
    # softmax(x + c) == softmax(x), so it cannot affect alpha or the context).
    score = jnp.sum(h * wf_ref[...], axis=-1)                        # (TB, L)

    # softmax over L (lane axis), numerically stabilized.
    m = jnp.max(score, axis=-1, keepdims=True)
    e = jnp.exp(score - m)
    s = jnp.sum(e, axis=-1, keepdims=True)
    alpha = e * pl.reciprocal(s, approx=False)                       # (TB, L)

    # context_vector = sum_L alpha * encoder_out
    ctx = jnp.sum(enc * alpha[:, :, None], axis=1)                   # (TB, E)

    alpha_ref[...] = alpha.astype(alpha_ref.dtype)
    ctx_ref[...] = ctx.astype(ctx_ref.dtype)


def soft_attention(encoder_out, decoder_hidden, params, *, block_b=None):
    """encoder_out: (B, L, E) f32; decoder_hidden: (B, D) f32.

    block_b: batch rows per grid step.  Default = B (whole batch in one step,
    which amortizes all per-step overhead at small sizes).  On v7x one could
    pass block_b = B // 2 (multiple of 8) so both TensorCores get a share.
    """
    B, L, E = encoder_out.shape
    D = decoder_hidden.shape[1]
    we, be, wd, bd, wf = (params["we"], params["be"], params["wd"],
                          params["bd"], params["wf"])
    A = we.shape[0]

    if block_b is None:
        block_b = B
    assert B % block_b == 0, "block_b must divide the batch"
    assert block_b == B or block_b % 8 == 0, "partial batch blocks must be sublane-aligned"
    nb = B // block_b

    # Wrapper-side, loop-invariant layout plumbing:
    we_t = we.T                        # (E, A): no in-kernel transpose
    wd_t = wd.T                        # (D, A)
    bias = (be + bd).reshape(1, A)     # fold both projection biases
    wf2 = wf.reshape(1, A)             # full_att weight row (bias dropped)

    grid_spec = pl.GridSpec(
        grid=(nb,),
        in_specs=[
            pl.BlockSpec((block_b, L, E), lambda b: (b, 0, 0)),  # encoder_out block
            pl.BlockSpec((block_b, D),    lambda b: (b, 0)),     # decoder_hidden block
            pl.BlockSpec((E, A),          lambda b: (0, 0)),     # encoder_att.weight^T
            pl.BlockSpec((D, A),          lambda b: (0, 0)),     # decoder_att.weight^T
            pl.BlockSpec((1, A),          lambda b: (0, 0)),     # folded bias
            pl.BlockSpec((1, A),          lambda b: (0, 0)),     # full_att.weight
        ],
        out_specs=[
            pl.BlockSpec((block_b, E), lambda b: (b, 0)),        # context_vector
            pl.BlockSpec((block_b, L), lambda b: (b, 0)),        # alpha
        ],
    )

    ctx, alpha = pl.pallas_call(
        soft_attention_kernel,
        out_shape=(
            jax.ShapeDtypeStruct((B, E), jnp.float32),
            jax.ShapeDtypeStruct((B, L), jnp.float32),
        ),
        grid_spec=grid_spec,
        compiler_params=pltpu.CompilerParams(
            dimension_semantics=("parallel",)),
    )(encoder_out, decoder_hidden, we_t, wd_t, bias, wf2)
    return ctx, alpha


def init_params(key, dim_encoder, dim_decoder, dim_attention):
    """Deterministic nn.Linear-style init: U(-1/sqrt(fan_in), 1/sqrt(fan_in))."""
    ks = jax.random.split(key, 6)

    def lin(kw, kb, out_f, in_f):
        bound = 1.0 / jnp.sqrt(in_f)
        w = jax.random.uniform(kw, (out_f, in_f), jnp.float32, -bound, bound)
        b = jax.random.uniform(kb, (out_f,), jnp.float32, -bound, bound)
        return w, b

    we, be = lin(ks[0], ks[1], dim_attention, dim_encoder)
    wd, bd = lin(ks[2], ks[3], dim_attention, dim_decoder)
    wf, bf = lin(ks[4], ks[5], 1, dim_attention)
    return {"we": we, "be": be, "wd": wd, "bd": bd, "wf": wf, "bf": bf}


def reference(encoder_out, decoder_hidden, p):
    """Pure-JAX reference mirroring the PyTorch forward (including full_att.bias)."""
    att1 = encoder_out @ p["we"].T + p["be"]                    # (B, L, A)
    att2 = decoder_hidden @ p["wd"].T + p["bd"]                 # (B, A)
    h = jnp.maximum(att1 + att2[:, None, :], 0.0)               # (B, L, A)
    att = (h @ p["wf"].T + p["bf"])[..., 0]                     # (B, L)
    alpha = jax.nn.softmax(att, axis=1)                         # (B, L)
    ctx = jnp.sum(encoder_out * alpha[..., None], axis=1)       # (B, E)
    return ctx, alpha


if __name__ == "__main__":
    B, L, E, D, A = 2, 16, 32, 24, 40   # batch, H*W, dim_encoder, dim_decoder, dim_attention

    key = jax.random.PRNGKey(0)
    k_enc, k_dec, k_par = jax.random.split(key, 3)
    encoder_out = jax.random.normal(k_enc, (B, L, E), jnp.float32)
    decoder_hidden = jax.random.normal(k_dec, (B, D), jnp.float32)
    params = init_params(k_par, E, D, A)

    ctx, alpha = soft_attention(encoder_out, decoder_hidden, params)
    jax.block_until_ready((ctx, alpha))

    ctx_ref, alpha_ref = reference(encoder_out, decoder_hidden, params)
    assert jnp.allclose(ctx, ctx_ref, atol=1e-5, rtol=1e-5), "context mismatch"
    assert jnp.allclose(alpha, alpha_ref, atol=1e-5, rtol=1e-5), "alpha mismatch"
    assert jnp.allclose(jnp.sum(alpha, axis=1), 1.0, atol=1e-5), "alpha not normalized"

    print("KERNEL_OK")
</pallas_src>

<mosaic_0001>
module attributes {stable_mosaic.version = 11 : i64} {
  func.func @soft_attention_kernel(%arg0: i32, %arg1: memref<2x16x32xf32, #tpu.memory_space<vmem>>, %arg2: memref<2x24xf32, #tpu.memory_space<vmem>>, %arg3: memref<32x40xf32, #tpu.memory_space<vmem>>, %arg4: memref<24x40xf32, #tpu.memory_space<vmem>>, %arg5: memref<1x40xf32, #tpu.memory_space<vmem>>, %arg6: memref<1x40xf32, #tpu.memory_space<vmem>>, %arg7: memref<2x32xf32, #tpu.memory_space<vmem>>, %arg8: memref<2x16xf32, #tpu.memory_space<vmem>>) attributes {dimension_semantics = [#tpu.dimension_semantics<parallel>], iteration_bounds = array<i64: 1>, scalar_prefetch = 0 : i64, scratch_operands = 0 : i64, tpu.core_type = #tpu.core_type<tc>, window_params = [{transform_indices = @transform_0, window_bounds = array<i64: 2, 16, 32>}, {transform_indices = @transform_1, window_bounds = array<i64: 2, 24>}, {pipeline_mode = #tpu.pipeline_mode<synchronous>, transform_indices = @transform_2, window_bounds = array<i64: 32, 40>}, {pipeline_mode = #tpu.pipeline_mode<synchronous>, transform_indices = @transform_3, window_bounds = array<i64: 24, 40>}, {pipeline_mode = #tpu.pipeline_mode<synchronous>, transform_indices = @transform_4, window_bounds = array<i64: 1, 40>}, {pipeline_mode = #tpu.pipeline_mode<synchronous>, transform_indices = @transform_5, window_bounds = array<i64: 1, 40>}, {transform_indices = @transform_6, window_bounds = array<i64: 2, 32>}, {transform_indices = @transform_7, window_bounds = array<i64: 2, 16>}]} {
    %c0 = arith.constant 0 : index
    %c0_0 = arith.constant 0 : index
    %c0_1 = arith.constant 0 : index
    %0 = vector.load %arg1[%c0, %c0_0, %c0_1] : memref<2x16x32xf32, #tpu.memory_space<vmem>>, vector<2x16x32xf32>
    %c0_2 = arith.constant 0 : index
    %c0_3 = arith.constant 0 : index
    %1 = vector.load %arg2[%c0_2, %c0_3] : memref<2x24xf32, #tpu.memory_space<vmem>>, vector<2x24xf32>
    %2 = vector.shape_cast %0 : vector<2x16x32xf32> to vector<32x32xf32>
    %c0_4 = arith.constant 0 : index
    %c0_5 = arith.constant 0 : index
    %3 = vector.load %arg3[%c0_4, %c0_5] : memref<32x40xf32, #tpu.memory_space<vmem>>, vector<32x40xf32>
    %cst = arith.constant dense<0.000000e+00> : vector<32x40xf32>
    %4 = tpu.matmul %2, %3, %cst {dimension_numbers = #tpu.dot_dimension_numbers<[1], [0], [0], [1], [0, 0, 1, 1], [], []>} : vector<32x32xf32>, vector<32x40xf32>, vector<32x40xf32> -> vector<32x40xf32>
    %c0_6 = arith.constant 0 : index
    %c0_7 = arith.constant 0 : index
    %5 = vector.load %arg4[%c0_6, %c0_7] : memref<24x40xf32, #tpu.memory_space<vmem>>, vector<24x40xf32>
    %cst_8 = arith.constant dense<0.000000e+00> : vector<2x40xf32>
    %6 = tpu.matmul %1, %5, %cst_8 {dimension_numbers = #tpu.dot_dimension_numbers<[1], [0], [0], [1], [0, 0, 1, 1], [], []>} : vector<2x24xf32>, vector<24x40xf32>, vector<2x40xf32> -> vector<2x40xf32>
    %c0_9 = arith.constant 0 : index
    %c0_10 = arith.constant 0 : index
    %7 = vector.load %arg5[%c0_9, %c0_10] : memref<1x40xf32, #tpu.memory_space<vmem>>, vector<1x40xf32>
    %8 = vector.broadcast %7 : vector<1x40xf32> to vector<2x40xf32>
    %9 = arith.addf %6, %8 : vector<2x40xf32>
    %10 = vector.shape_cast %4 : vector<32x40xf32> to vector<2x16x40xf32>
    %11 = vector.shape_cast %9 : vector<2x40xf32> to vector<2x1x40xf32>
    %12 = vector.broadcast %11 : vector<2x1x40xf32> to vector<2x16x40xf32>
    %13 = arith.addf %10, %12 : vector<2x16x40xf32>
    %cst_11 = arith.constant 0.000000e+00 : f32
    %14 = vector.broadcast %cst_11 : f32 to vector<2x16x40xf32>
    %15 = arith.maximumf %13, %14 : vector<2x16x40xf32>
    %c0_12 = arith.constant 0 : index
    %c0_13 = arith.constant 0 : index
    %16 = vector.load %arg6[%c0_12, %c0_13] : memref<1x40xf32, #tpu.memory_space<vmem>>, vector<1x40xf32>
    %17 = vector.shape_cast %16 : vector<1x40xf32> to vector<1x1x40xf32>
    %18 = vector.broadcast %17 : vector<1x1x40xf32> to vector<2x16x40xf32>
    %19 = arith.mulf %15, %18 : vector<2x16x40xf32>
    %cst_14 = arith.constant dense<0.000000e+00> : vector<2x16xf32>
    %20 = vector.multi_reduction <add>, %19, %cst_14 [2] : vector<2x16x40xf32> to vector<2x16xf32>
    %cst_15 = arith.constant dense<0xFF800000> : vector<2xf32>
    %21 = vector.multi_reduction <maximumf>, %20, %cst_15 [1] : vector<2x16xf32> to vector<2xf32>
    %22 = vector.shape_cast %21 : vector<2xf32> to vector<2x1xf32>
    %23 = vector.broadcast %22 : vector<2x1xf32> to vector<2x16xf32>
    %24 = arith.subf %20, %23 : vector<2x16xf32>
    %25 = math.exp %24 : vector<2x16xf32>
    %cst_16 = arith.constant dense<0.000000e+00> : vector<2xf32>
    %26 = vector.multi_reduction <add>, %25, %cst_16 [1] : vector<2x16xf32> to vector<2xf32>
    %27 = vector.shape_cast %26 : vector<2xf32> to vector<2x1xf32>
    %28 = tpu.reciprocal %27 : vector<2x1xf32> -> vector<2x1xf32>
    %29 = vector.broadcast %28 : vector<2x1xf32> to vector<2x16xf32>
    %30 = arith.mulf %25, %29 : vector<2x16xf32>
    %31 = vector.shape_cast %30 : vector<2x16xf32> to vector<2x16x1xf32>
    %32 = vector.broadcast %31 : vector<2x16x1xf32> to vector<2x16x32xf32>
    %33 = arith.mulf %0, %32 : vector<2x16x32xf32>
    %cst_17 = arith.constant dense<0.000000e+00> : vector<2x32xf32>
    %34 = vector.multi_reduction <add>, %33, %cst_17 [1] : vector<2x16x32xf32> to vector<2x32xf32>
    %c0_18 = arith.constant 0 : index
    %c0_19 = arith.constant 0 : index
    %35 = vector.load %arg8[%c0_18, %c0_19] : memref<2x16xf32, #tpu.memory_space<vmem>>, vector<2x16xf32>
    tpu.vector_store %arg8[%c0_18, %c0_19], %30 {strides = array<i32>} : memref<2x16xf32, #tpu.memory_space<vmem>>, vector<2x16xf32>,
    %c0_20 = arith.constant 0 : index
    %c0_21 = arith.constant 0 : index
    %36 = vector.load %arg7[%c0_20, %c0_21] : memref<2x32xf32, #tpu.memory_space<vmem>>, vector<2x32xf32>
    tpu.vector_store %arg7[%c0_20, %c0_21], %34 {strides = array<i32>} : memref<2x32xf32, #tpu.memory_space<vmem>>, vector<2x32xf32>,
    return
  }
  func.func @transform_0(%arg0: i32) -> (i32, i32, i32) {
    %c0_i32 = arith.constant 0 : i32
    %c0_i32_0 = arith.constant 0 : i32
    %c0_i32_1 = arith.constant 0 : i32
    return %arg0, %c0_i32, %c0_i32_0 : i32, i32, i32
  }
  func.func @transform_1(%arg0: i32) -> (i32, i32) {
    %c0_i32 = arith.constant 0 : i32
    %c0_i32_0 = arith.constant 0 : i32
    return %arg0, %c0_i32 : i32, i32
  }
  func.func @transform_2(%arg0: i32) -> (i32, i32) {
    %c0_i32 = arith.constant 0 : i32
    %c0_i32_0 = arith.constant 0 : i32
    %c0_i32_1 = arith.constant 0 : i32
    return %c0_i32, %c0_i32_0 : i32, i32
  }
  func.func @transform_3(%arg0: i32) -> (i32, i32) {
    %c0_i32 = arith.constant 0 : i32
    %c0_i32_0 = arith.constant 0 : i32
    %c0_i32_1 = arith.constant 0 : i32
    return %c0_i32, %c0_i32_0 : i32, i32
  }
  func.func @transform_4(%arg0: i32) -> (i32, i32) {
    %c0_i32 = arith.constant 0 : i32
    %c0_i32_0 = arith.constant 0 : i32
    %c0_i32_1 = arith.constant 0 : i32
    return %c0_i32, %c0_i32_0 : i32, i32
  }
  func.func @transform_5(%arg0: i32) -> (i32, i32) {
    %c0_i32 = arith.constant 0 : i32
    %c0_i32_0 = arith.constant 0 : i32
    %c0_i32_1 = arith.constant 0 : i32
    return %c0_i32, %c0_i32_0 : i32, i32
  }
  func.func @transform_6(%arg0: i32) -> (i32, i32) {
    %c0_i32 = arith.constant 0 : i32
    %c0_i32_0 = arith.constant 0 : i32
    return %arg0, %c0_i32 : i32, i32
  }
  func.func @transform_7(%arg0: i32) -> (i32, i32) {
    %c0_i32 = arith.constant 0 : i32
    %c0_i32_0 = arith.constant 0 : i32
    return %arg0, %c0_i32 : i32, i32
  }
}

</mosaic_0001>

<llo_original>
// kernel: tpu_custom_call.1
$region0: #{tpu_custom_call.1}
  #allocation0 [shape = 'u32[]', space=smem, size = 0x4, offset = 0x4, fixed_abs, tag = 'smem constant byte address 0x4 - core index']
  #allocation1 [shape = 'u32[144,128]{1,0:T(1,128)}', space=vmem, size = 0x12000, scoped, tag = 'internal scratch']
  %s0 = inlined_call_operand.hbm [shape: f32[2,16,32], index: 0, kind: input, shape index: {}]
  %s1 = inlined_call_operand.vmem [shape: f32[2,24], index: 1, kind: input, shape index: {}]
  %s2 = inlined_call_operand.hbm [shape: f32[32,40], index: 2, kind: input, shape index: {}]
  %s3 = inlined_call_operand.hbm [shape: f32[24,40], index: 3, kind: input, shape index: {}]
  %s4 = inlined_call_operand.vmem [shape: f32[1,40], index: 4, kind: input, shape index: {}]
  %s5 = inlined_call_operand.vmem [shape: f32[1,40], index: 5, kind: input, shape index: {}]
  %s6 = inlined_call_operand.hbm [shape: f32[2,32], index: 6, kind: output, shape index: {0}]
  %s7 = inlined_call_operand.hbm [shape: f32[2,16], index: 7, kind: output, shape index: {1}]
  %8 = xla_tuple %s6, %s7
  %s9 = sld [smem:[#allocation0]]
  $region54: #{tpu_custom_call.1} parent=0
    _
  %s11 = ssub.s32 1, %s9
  %s12 = scalar_select 0, %s11, %s9
  $region1: #{tpu_custom_call.1} parent=0
    #allocation2 [shape = 'u8[16384]{0}', space=vmem, size = 0x4000, scoped, tag = 'input window, operand 0, single buffered']
    #allocation3 [shape = 's32[1]{0}', space=sflag, size = 0x4, scoped, tag = 'scoped memory for tpu_custom_call.1']
    #allocation4 [shape = 's32[1]{0}', space=sflag, size = 0x4, scoped, tag = 'scoped memory for tpu_custom_call.1']
    #allocation5 [shape = 'u8[16384]{0}', space=vmem, size = 0x4000, scoped, tag = 'input window, operand 2, single buffered']
    #allocation6 [shape = 's32[1]{0}', space=sflag, size = 0x4, scoped, tag = 'scoped memory for tpu_custom_call.1']
    #allocation7 [shape = 'u8[12288]{0}', space=vmem, size = 0x3000, scoped, tag = 'input window, operand 3, single buffered']
    #allocation8 [shape = 'u8[1024]{0}', space=vmem, size = 0x400, scoped, tag = 'output window, operand 0, single buffered']
    #allocation9 [shape = 'u8[1024]{0}', space=vmem, size = 0x400, scoped, tag = 'output window, operand 1, single buffered']
    #allocation10 [shape = 's32[1]{0}', space=sflag, size = 0x4, scoped, tag = 'scoped memory for tpu_custom_call.1']
    %13 = vsyncpa [#allocation3], 0
    %14 = vsyncpa [#allocation6], 0
    %15 = vsyncpa [#allocation4], 0
    %16 = vsyncpa [#allocation10], 0
    // Predicated region
    $region2: #{tpu_custom_call.1} parent=1 // pred_check
      _
    $region3: #{tpu_custom_call.1} parent=1 // pred_check_branch
      %18 = sbr.rel (0) target = $region5
    $region4: #{tpu_custom_call.1} parent=1 // pred_region
      %s20 = ssub.s32 512, 512
      %21 = vsyncadd [#allocation3], %s20
      %s22 = sshll.u32 [#allocation2], 4
      %s23 = int_to_ptr.vmem [resolvable:$true] %s22
      %28 = dma.hbm_to_vmem [thread:$0]  %s0, 512, %s23, [#allocation3], 128, 128, 8
    $region5: #{tpu_custom_call.1} parent=1 // pred_fallthru
      _
    // Predicated region
    $region6: #{tpu_custom_call.1} parent=1 // pred_check
      _
    $region7: #{tpu_custom_call.1} parent=1 // pred_check_branch
      %30 = sbr.rel (0) target = $region9
    $region8: #{tpu_custom_call.1} parent=1 // pred_region
      _
    $region9: #{tpu_custom_call.1} parent=1 // pred_fallthru
      _
    // Predicated region
    $region10: #{tpu_custom_call.1} parent=1 // pred_check
      _
    $region11: #{tpu_custom_call.1} parent=1 // pred_check_branch
      %32 = sbr.rel (0) target = $region13
    $region12: #{tpu_custom_call.1} parent=1 // pred_region
      %s34 = ssub.s32 512, 512
      %35 = vsyncadd [#allocation6], %s34
      %s36 = sshll.u32 [#allocation5], 4
      %s37 = int_to_ptr.vmem [resolvable:$true] %s36
      %42 = dma.hbm_to_vmem [thread:$0]  %s2, 512, %s37, [#allocation6], 128, 128, 8
    $region13: #{tpu_custom_call.1} parent=1 // pred_fallthru
      _
    // Predicated region
    $region14: #{tpu_custom_call.1} parent=1 // pred_check
      _
    $region15: #{tpu_custom_call.1} parent=1 // pred_check_branch
      %44 = sbr.rel (0) target = $region17
    $region16: #{tpu_custom_call.1} parent=1 // pred_region
      %s46 = ssub.s32 384, 384
      %47 = vsyncadd [#allocation6], %s46
      %s48 = sshll.u32 [#allocation7], 4
      %s49 = int_to_ptr.vmem [resolvable:$true] %s48
      %54 = dma.hbm_to_vmem [thread:$0]  %s3, 384, %s49, [#allocation6], 128, 128, 8
    $region17: #{tpu_custom_call.1} parent=1 // pred_fallthru
      _
    // Predicated region
    $region18: #{tpu_custom_call.1} parent=1 // pred_check
      _
    $region19: #{tpu_custom_call.1} parent=1 // pred_check_branch
      %56 = sbr.rel (0) target = $region21
    $region20: #{tpu_custom_call.1} parent=1 // pred_region
      _
    $region21: #{tpu_custom_call.1} parent=1 // pred_fallthru
      _
    // Predicated region
    $region22: #{tpu_custom_call.1} parent=1 // pred_check
      _
    $region23: #{tpu_custom_call.1} parent=1 // pred_check_branch
      %58 = sbr.rel (0) target = $region25
    $region24: #{tpu_custom_call.1} parent=1 // pred_region
      _
    $region25: #{tpu_custom_call.1} parent=1 // pred_fallthru
      _
    // Predicated region
    $region26: #{tpu_custom_call.1} parent=1 // pred_check
      _
    $region27: #{tpu_custom_call.1} parent=1 // pred_check_branch
      %60 = sbr.rel (0) target = $region29
    $region28: #{tpu_custom_call.1} parent=1 // pred_region
      %61 = dma.done [#allocation3], 512
    $region29: #{tpu_custom_call.1} parent=1 // pred_fallthru
      _
    // Predicated region
    $region30: #{tpu_custom_call.1} parent=1 // pred_check
      _
    $region31: #{tpu_custom_call.1} parent=1 // pred_check_branch
      %63 = sbr.rel (0) target = $region33
    $region32: #{tpu_custom_call.1} parent=1 // pred_region
      %64 = dma.done [#allocation6], 512
    $region33: #{tpu_custom_call.1} parent=1 // pred_fallthru
      _
    // Predicated region
    $region34: #{tpu_custom_call.1} parent=1 // pred_check
      _
    $region35: #{tpu_custom_call.1} parent=1 // pred_check_branch
      %66 = sbr.rel (0) target = $region37
    $region36: #{tpu_custom_call.1} parent=1 // pred_region
      %67 = dma.done [#allocation6], 384
    $region37: #{tpu_custom_call.1} parent=1 // pred_fallthru
      _
    %v68 = vld [vmem:[#allocation2] sm:$0xff]
    %v69 = vld [vmem:[#allocation2 + $0x8] sm:$0xff]
    %v70 = vld [vmem:[#allocation2 + $0x10] sm:$0xff]
    %v71 = vld [vmem:[#allocation2 + $0x18] sm:$0xff]
    %v72 = vld [vmem:[%s1] sm:$0x3]
    %v73 = vld [vmem:[#allocation5] sm:$0xff]
    %v74 = vld [vmem:[#allocation5 + $0x8] sm:$0xff]
    %v75 = vld [vmem:[#allocation5 + $0x10] sm:$0xff]
    %v76 = vld [vmem:[#allocation5 + $0x18] sm:$0xff]
    %vm77 = vcmask 261120
    %v79 = vsel %vm77, %v68, 0
    %v82 = vsel %vm77, %v69, 0
    %v85 = vsel %vm77, %v70, 0
    %v88 = vsel %vm77, %v71, 0
    %90 = vmatprep.subr.mxu0 0.0
    %91 = vmatpush1.msra.mxu0 %v73
    %92 = vmatprep.subr.mxu0 0.0
    %93 = vmatpush1.msra.mxu0 %v74
    %94 = vmatprep.subr.mxu0 0.0
    %95 = vmatpush1.msra.mxu0 %v75
    %96 = vmatprep.subr.mxu0 0.0
    %97 = vmatpush1.msra.mxu0 %v76
    %98 = vmatprep.subr.mxu0 0.0
    %99 = vmatpush1.msra.mxu0 0.0
    %100 = vmatprep.subr.mxu0 0.0
    %101 = vmatpush1.msra.mxu0 0.0
    %102 = vmatprep.subr.mxu0 0.0
    %103 = vmatpush1.msra.mxu0 0.0
    %104 = vmatprep.subr.mxu0 0.0
    %105 = vmatpush1.msra.mxu0 0.0
    %106 = vmatprep.subr.mxu0 0.0
    %107 = vmatpush1.msra.mxu0 0.0
    %108 = vmatprep.subr.mxu0 0.0
    %109 = vmatpush1.msra.mxu0 0.0
    %110 = vmatprep.subr.mxu0 0.0
    %111 = vmatpush1.msra.mxu0 0.0
    %112 = vmatprep.subr.mxu0 0.0
    %113 = vmatpush1.msra.mxu0 0.0
    %114 = vmatprep.subr.mxu0 0.0
    %115 = vmatpush1.msra.mxu0 0.0
    %116 = vmatprep.subr.mxu0 0.0
    %117 = vmatpush1.msra.mxu0 0.0
    %118 = vmatprep.subr.mxu0 0.0
    %119 = vmatpush1.msra.mxu0 0.0
    %120 = vmatprep.subr.mxu0 0.0
    %121 = vmatpush1.msra.mxu0 0.0
    %122 = vmatprep.subr.mxu0 0.0
    %123 = vmatpush1.msra.mxu0 0.0
    %124 = vmatprep.subr.mxu0 0.0
    %125 = vmatpush1.msra.mxu0 0.0
    %126 = vmatprep.subr.mxu0 0.0
    %127 = vmatpush1.msra.mxu0 0.0
    %128 = vmatprep.subr.mxu0 0.0
    %129 = vmatpush1.msra.mxu0 0.0
    %130 = vmatprep.subr.mxu0 0.0
    %131 = vmatpush1.msra.mxu0 0.0
    %132 = vmatprep.subr.mxu0 0.0
    %133 = vmatpush1.msra.mxu0 0.0
    %134 = vmatprep.subr.mxu0 0.0
    %135 = vmatpush1.msra.mxu0 0.0
    %136 = vmatprep.subr.mxu0 0.0
    %137 = vmatpush1.msra.mxu0 0.0
    %138 = vmatprep.subr.mxu0 0.0
    %139 = vmatpush1.msra.mxu0 0.0
    %140 = vmatprep.subr.mxu0 0.0
    %141 = vmatpush1.msra.mxu0 0.0
    %142 = vmatprep.subr.mxu0 0.0
    %143 = vmatpush1.msra.mxu0 0.0
    %144 = vmatprep.subr.mxu0 0.0
    %145 = vmatpush1.msra.mxu0 0.0
    %146 = vmatprep.subr.mxu0 0.0
    %147 = vmatpush1.msra.mxu0 0.0
    %148 = vmatprep.subr.mxu0 0.0
    %149 = vmatpush1.msra.mxu0 0.0
    %150 = vmatprep.subr.mxu0 0.0
    %151 = vmatpush1.msra.mxu0 0.0
    %152 = vmatprep.subr.mxu0 0.0
    %153 = vmatpush1.msra.mxu0 0.0
    %154 = vmatprep.mubr.f32.mxu0 0.0
    %155 = vmatmul.mubr.f32.gmra.mrb[0].mxu0 %v79
    %v156 = vpop.f32.mrb[0].mxu0
    %v157 = vadd.f32 0.0, %v156
    %v158 = vpop.f32.mrb[0].mxu0
    %159 = vmatprep.mubr.f32.mxu0 0.0
    %160 = vmatmul.mubr.f32.gmra.mrb[0].mxu0 %v82
    %v161 = vpop.f32.mrb[0].mxu0
    %v162 = vadd.f32 0.0, %v161
    %v163 = vpop.f32.mrb[0].mxu0
    %164 = vmatprep.mubr.f32.mxu0 0.0
    %165 = vmatmul.mubr.f32.gmra.mrb[0].mxu0 %v85
    %v166 = vpop.f32.mrb[0].mxu0
    %v167 = vadd.f32 0.0, %v166
    %v168 = vpop.f32.mrb[0].mxu0
    %169 = vmatprep.mubr.f32.mxu0 0.0
    %170 = vmatmul.mubr.f32.gmra.mrb[0].mxu0 %v88
    %v171 = vpop.f32.mrb[0].mxu0
    %v172 = vadd.f32 0.0, %v171
    %v173 = vpop.f32.mrb[0].mxu0
    %174 = vdwg.mxu0
    %v175 = vld [vmem:[#allocation7] sm:$0xff]
    %v176 = vld [vmem:[#allocation7 + $0x8] sm:$0xff]
    %v177 = vld [vmem:[#allocation7 + $0x10] sm:$0xff]
    %v178 = vld [vmem:[%s4] sm:$0x1]
    %v180 = vlaneseq
    %v181 = vshrl.u32 %v180, 7
    %v182 = vsub.s32 0, %v181
    %v183 = vrot.slane %v178, %v182
    %vm185 = vcmask 195584
    %v187 = vsel %vm185, %v72, 0
    %189 = vmatprep.subr.mxu0 0.0
    %190 = vmatpush1.msra.mxu0 %v175
    %191 = vmatprep.subr.mxu0 0.0
    %192 = vmatpush1.msra.mxu0 %v176
    %193 = vmatprep.subr.mxu0 0.0
    %194 = vmatpush1.msra.mxu0 %v177
    %195 = vmatprep.subr.mxu0 0.0
    %196 = vmatpush1.msra.mxu0 0.0
    %197 = vmatprep.subr.mxu0 0.0
    %198 = vmatpush1.msra.mxu0 0.0
    %199 = vmatprep.subr.mxu0 0.0
    %200 = vmatpush1.msra.mxu0 0.0
    %201 = vmatprep.subr.mxu0 0.0
    %202 = vmatpush1.msra.mxu0 0.0
    %203 = vmatprep.subr.mxu0 0.0
    %204 = vmatpush1.msra.mxu0 0.0
    %205 = vmatprep.subr.mxu0 0.0
    %206 = vmatpush1.msra.mxu0 0.0
    %207 = vmatprep.subr.mxu0 0.0
    %208 = vmatpush1.msra.mxu0 0.0
    %209 = vmatprep.subr.mxu0 0.0
    %210 = vmatpush1.msra.mxu0 0.0
    %211 = vmatprep.subr.mxu0 0.0
    %212 = vmatpush1.msra.mxu0 0.0
    %213 = vmatprep.subr.mxu0 0.0
    %214 = vmatpush1.msra.mxu0 0.0
    %215 = vmatprep.subr.mxu0 0.0
    %216 = vmatpush1.msra.mxu0 0.0
    %217 = vmatprep.subr.mxu0 0.0
    %218 = vmatpush1.msra.mxu0 0.0
    %219 = vmatprep.subr.mxu0 0.0
    %220 = vmatpush1.msra.mxu0 0.0
    %221 = vmatprep.subr.mxu0 0.0
    %222 = vmatpush1.msra.mxu0 0.0
    %223 = vmatprep.subr.mxu0 0.0
    %224 = vmatpush1.msra.mxu0 0.0
    %225 = vmatprep.subr.mxu0 0.0
    %226 = vmatpush1.msra.mxu0 0.0
    %227 = vmatprep.subr.mxu0 0.0
    %228 = vmatpush1.msra.mxu0 0.0
    %229 = vmatprep.subr.mxu0 0.0
    %230 = vmatpush1.msra.mxu0 0.0
    %231 = vmatprep.subr.mxu0 0.0
    %232 = vmatpush1.msra.mxu0 0.0
    %233 = vmatprep.subr.mxu0 0.0
    %234 = vmatpush1.msra.mxu0 0.0
    %235 = vmatprep.subr.mxu0 0.0
    %236 = vmatpush1.msra.mxu0 0.0
    %237 = vmatprep.subr.mxu0 0.0
    %238 = vmatpush1.msra.mxu0 0.0
    %239 = vmatprep.subr.mxu0 0.0
    %240 = vmatpush1.msra.mxu0 0.0
    %241 = vmatprep.subr.mxu0 0.0
    %242 = vmatpush1.msra.mxu0 0.0
    %243 = vmatprep.subr.mxu0 0.0
    %244 = vmatpush1.msra.mxu0 0.0
    %245 = vmatprep.subr.mxu0 0.0
    %246 = vmatpush1.msra.mxu0 0.0
    %247 = vmatprep.subr.mxu0 0.0
    %248 = vmatpush1.msra.mxu0 0.0
    %249 = vmatprep.subr.mxu0 0.0
    %250 = vmatpush1.msra.mxu0 0.0
    %251 = vmatprep.subr.mxu0 0.0
    %252 = vmatpush1.msra.mxu0 0.0
    %253 = vmatprep.mubr.f32.mxu0 0.0
    %254 = vmatmul.mubr.f32.gmra.mrb[0].mxu0 %v187
    %v255 = vpop.f32.mrb[0].mxu0
    %v256 = vadd.f32 %v183, %v255
    %v257 = vpop.f32.mrb[0].mxu0
    %258 = vdwg.mxu0
    %v261 = vunpack.c.l.s4 1966171168
    %v262 = vunpack.c.0.s8 %v261
    %v263 = vlaneseq
    %v264 = vshrl.u32 %v263, 7
    %v265 = vsub.s32 %v262, %v264
    %v266 = vrot.slane %v256, %v265
    %v267 = vcombine.high %v266, %v266
    %v269 = vunpack.c.l.s4 1966171168
    %v270 = vunpack.c.0.s8 %v269
    %v271 = vlaneseq
    %v272 = vshrl.u32 %v271, 7
    %v273 = vsub.s32 %v270, %v272
    %v274 = vrot.slane %v266, %v273
    %v276 = vunpack.c.l.s4 1966171168
    %v277 = vunpack.c.0.s8 %v276
    %v278 = vlaneseq
    %v279 = vshrl.u32 %v278, 7
    %v280 = vsub.s32 %v277, %v279
    %v281 = vrot.slane %v267, %v280
    %v282 = vlaneseq
    %v283 = vshrl.u32 %v282, 7
    %v284 = vsub.s32 0, %v283
    %v285 = vrot.slane %v274, %v284
    %v286 = vlaneseq
    %v287 = vshrl.u32 %v286, 7
    %v288 = vsub.s32 0, %v287
    %v289 = vrot.slane %v281, %v288
    %v292 = vadd.f32 %v157, %v285
    %v293 = vadd.f32 %v162, %v285
    %v294 = vadd.f32 %v167, %v289
    %v295 = vadd.f32 %v172, %v289
    %v296 = vmax.f32 %v292, 0.0
    %v297 = vmax.f32 %v293, 0.0
    %v298 = vmax.f32 %v294, 0.0
    %v299 = vmax.f32 %v295, 0.0
    %v300 = vld [vmem:[%s5] sm:$0x1]
    %v302 = vlaneseq
    %v303 = vshrl.u32 %v302, 7
    %v304 = vsub.s32 0, %v303
    %v305 = vrot.slane %v300, %v304
    %v307 = vmul.f32 %v296, %v305
    %v308 = vmul.f32 %v297, %v305
    %v309 = vmul.f32 %v298, %v305
    %v310 = vmul.f32 %v299, %v305
    %vm311 = vcmask 326656
    %v312 = vsel %vm311, %v307, 0.0
    %313 = vadd.xlane.f32.xlu0 %v312
    %v314 = vpop.xlane.xlu0 %313
    %v315 = vsel %vm311, %v308, 0.0
    %316 = vadd.xlane.f32.xlu0 %v315
    %v317 = vpop.xlane.xlu0 %316
    %v318 = vsel %vm311, %v309, 0.0
    %319 = vadd.xlane.f32.xlu0 %v318
    %v320 = vpop.xlane.xlu0 %319
    %v321 = vsel %vm311, %v310, 0.0
    %322 = vadd.xlane.f32.xlu0 %v321
    %v323 = vpop.xlane.xlu0 %322
    %v328 = vlaneseq
    %v329 = vand.u32 %v328, 127
    %v330 = vlaneseq
    %v331 = vshrl.u32 %v330, 7
    %v332 = vsub.s32 %v329, %v331
    %v333 = vrot.slane %v314, %v332
    %v334 = vadd.s32 %v329, 4294967288
    %v335 = vlaneseq
    %v336 = vshrl.u32 %v335, 7
    %v337 = vsub.s32 %v334, %v336
    %v338 = vrot.slane %v317, %v337
    %vm339 = vcmask 130112
    %v340 = vsel %vm339, %v338, %v333
    %v341 = vlaneseq
    %v342 = vshrl.u32 %v341, 7
    %v343 = vsub.s32 %v329, %v342
    %v344 = vrot.slane %v320, %v343
    %v345 = vlaneseq
    %v346 = vshrl.u32 %v345, 7
    %v347 = vsub.s32 %v334, %v346
    %v348 = vrot.slane %v323, %v347
    %v349 = vsel %vm339, %v348, %v344
    %vm350 = vcmask 1041409
    %v351 = vsel %vm350, %v349, %v340
    %vm353 = vcmask 123904
    %v354 = vsel %vm353, %v351, -inf
    %355 = vmax.xlane.f32.xlu0 %v354
    %v356 = vpop.xlane.xlu0 %355
    %v358 = vlaneseq
    %v359 = vshrl.u32 %v358, 7
    %v360 = vsub.s32 0, %v359
    %v361 = vrot.slane %v356, %v360
    %v362 = vlaneseq
    %v363 = vshrl.u32 %v362, 7
    %v364 = vsub.s32 1, %v363
    %v365 = vrot.slane %v356, %v364
    %v368 = vsub.f32 %v314, %v361
    %v369 = vsub.f32 %v317, %v361
    %v370 = vsub.f32 %v320, %v365
    %v371 = vsub.f32 %v323, %v365
    %v372 = vmul.f32 %v368, 1.442695
    %v373 = vpow.pop %v372
    %v374 = vmul.f32 %v369, 1.442695
    %v375 = vpow.pop %v374
    %v376 = vmul.f32 %v370, 1.442695
    %v377 = vpow.pop %v376
    %v378 = vmul.f32 %v371, 1.442695
    %v379 = vpow.pop %v378
    %384 = vset.pattern.permute.xlu0 0
    %385 = vperm.xlu0 %384, %v373
    %v386 = vpop.permute.xlu0 %385
    %387 = vset.pattern.permute.xlu0 0
    %388 = vperm.xlu0 %387, %v375
    %v389 = vpop.permute.xlu0 %388
    %390 = vset.pattern.permute.xlu0 0
    %391 = vperm.xlu0 %390, %v377
    %v392 = vpop.permute.xlu0 %391
    %393 = vset.pattern.permute.xlu0 0
    %394 = vperm.xlu0 %393, %v379
    %v395 = vpop.permute.xlu0 %394
    %v396 = vlaneseq
    %v397 = vshrl.u32 %v396, 7
    %v398 = vsub.s32 %v329, %v397
    %v399 = vrot.slane %v386, %v398
    %v400 = vlaneseq
    %v401 = vshrl.u32 %v400, 7
    %v402 = vsub.s32 %v334, %v401
    %v403 = vrot.slane %v389, %v402
    %v404 = vsel %vm339, %v403, %v399
    %v405 = vlaneseq
    %v406 = vshrl.u32 %v405, 7
    %v407 = vsub.s32 %v329, %v406
    %v408 = vrot.slane %v392, %v407
    %v409 = vlaneseq
    %v410 = vshrl.u32 %v409, 7
    %v411 = vsub.s32 %v334, %v410
    %v412 = vrot.slane %v395, %v411
    %v413 = vsel %vm339, %v412, %v408
    %v414 = vsel %vm350, %v413, %v404
    %v416 = vsel %vm353, %v414, 0.0
    %417 = vadd.xlane.f32.xlu0 %v416
    %v418 = vpop.xlane.xlu0 %417
    %v419 = vrcp.pop %v418
    %v421 = vlaneseq
    %v422 = vshrl.u32 %v421, 7
    %v423 = vsub.s32 0, %v422
    %v424 = vrot.slane %v419, %v423
    %v425 = vlaneseq
    %v426 = vshrl.u32 %v425, 7
    %v427 = vsub.s32 1, %v426
    %v428 = vrot.slane %v419, %v427
    %v431 = vmul.f32 %v373, %v424
    %v432 = vmul.f32 %v375, %v424
    %v433 = vmul.f32 %v377, %v428
    %v434 = vmul.f32 %v379, %v428
    %436 = vset.pattern.permute.xlu0 0
    %437 = vperm.xlu0 %436, %v431
    %v438 = vpop.permute.xlu0 %437
    %441 = vset.pattern.permute.xlu0 0
    %442 = vperm.xlu0 %441, %v432
    %v443 = vpop.permute.xlu0 %442
    %446 = vset.pattern.permute.xlu0 0
    %447 = vperm.xlu0 %446, %v433
    %v448 = vpop.permute.xlu0 %447
    %451 = vset.pattern.permute.xlu0 0
    %452 = vperm.xlu0 %451, %v434
    %v453 = vpop.permute.xlu0 %452
    %v455 = vmul.f32 %v68, %v438
    %v456 = vmul.f32 %v69, %v443
    %v457 = vmul.f32 %v70, %v448
    %v458 = vmul.f32 %v71, %v453
    %v459 = vsel %vm77, %v455, 0.0
    %v460 = vsel %vm77, %v456, 0.0
    %v461 = vadd.f32 %v459, %v460
    %v462 = vrot.slane %v461, 4
    %v463 = vadd.f32 %v461, %v462
    %v464 = vrot.slane %v463, 2
    %v465 = vadd.f32 %v463, %v464
    %v466 = vrot.slane %v465, 1
    %v467 = vadd.f32 %v465, %v466
    %v468 = vsel %vm77, %v457, 0.0
    %v469 = vsel %vm77, %v458, 0.0
    %v470 = vadd.f32 %v468, %v469
    %v471 = vrot.slane %v470, 4
    %v472 = vadd.f32 %v470, %v471
    %v473 = vrot.slane %v472, 2
    %v474 = vadd.f32 %v472, %v473
    %v475 = vrot.slane %v474, 1
    %v476 = vadd.f32 %v474, %v475
    %v477 = vlaneseq
    %v478 = vshrl.u32 %v477, 7
    %v479 = vsub.s32 %v329, %v478
    %v480 = vrot.slane %v438, %v479
    %v481 = vlaneseq
    %v482 = vshrl.u32 %v481, 7
    %v483 = vsub.s32 %v334, %v482
    %v484 = vrot.slane %v443, %v483
    %v485 = vsel %vm339, %v484, %v480
    %v486 = vlaneseq
    %v487 = vshrl.u32 %v486, 7
    %v488 = vsub.s32 %v329, %v487
    %v489 = vrot.slane %v448, %v488
    %v490 = vlaneseq
    %v491 = vshrl.u32 %v490, 7
    %v492 = vsub.s32 %v334, %v491
    %v493 = vrot.slane %v453, %v492
    %v494 = vsel %vm339, %v493, %v489
    %v495 = vsel %vm350, %v494, %v485
    %497 = vst.msk [vmem:[#allocation9] sm:$0x3] %vm353, %v495
    %v500 = vsel %vm350, %v476, %v467
    %vm502 = vcmask 254976
    %503 = vst.msk [vmem:[#allocation8] sm:$0x3] %vm502, %v500
    // Predicated region
    $region38: #{tpu_custom_call.1} parent=1 // pred_check
      _
    $region39: #{tpu_custom_call.1} parent=1 // pred_check_branch
      %505 = sbr.rel (0) target = $region41
    $region40: #{tpu_custom_call.1} parent=1 // pred_region
      %s507 = ssub.s32 32, 32
      %508 = vsyncadd [#allocation4], %s507
      %s510 = sshll.u32 [#allocation8], 4
      %s511 = int_to_ptr.vmem [resolvable:$true] %s510
      %513 = dma.vmem_to_hbm [thread:$0]  %s511, 32, %s6, [#allocation4]
    $region41: #{tpu_custom_call.1} parent=1 // pred_fallthru
      _
    // Predicated region
    $region42: #{tpu_custom_call.1} parent=1 // pred_check
      _
    $region43: #{tpu_custom_call.1} parent=1 // pred_check_branch
      %515 = sbr.rel (0) target = $region45
    $region44: #{tpu_custom_call.1} parent=1 // pred_region
      %s517 = ssub.s32 32, 32
      %518 = vsyncadd [#allocation10], %s517
      %s520 = sshll.u32 [#allocation9], 4
      %s521 = int_to_ptr.vmem [resolvable:$true] %s520
      %523 = dma.vmem_to_hbm [thread:$0]  %s521, 32, %s7, [#allocation10]
    $region45: #{tpu_custom_call.1} parent=1 // pred_fallthru
      _
    // Predicated region
    $region46: #{tpu_custom_call.1} parent=1 // pred_check
      _
    $region47: #{tpu_custom_call.1} parent=1 // pred_check_branch
      %525 = sbr.rel (0) target = $region49
    $region48: #{tpu_custom_call.1} parent=1 // pred_region
      %526 = dma.done [#allocation4], 32
    $region49: #{tpu_custom_call.1} parent=1 // pred_fallthru
      _
    // Predicated region
    $region50: #{tpu_custom_call.1} parent=1 // pred_check
      _
    $region51: #{tpu_custom_call.1} parent=1 // pred_check_branch
      %528 = sbr.rel (0) target = $region53
    $region52: #{tpu_custom_call.1} parent=1 // pred_region
      %529 = dma.done [#allocation10], 32
    $region53: #{tpu_custom_call.1} parent=1 // pred_fallthru
      _
    %530 = vsyncpa [#allocation3], 1
    %531 = vsyncpa [#allocation6], 1
    %532 = vsyncpa [#allocation4], 1
    %533 = vsyncpa [#allocation10], 1

</llo_original>
